<compile_context>
chip_gen: v6e
topology: v6e:2x2x1
jax: 0.10.0
libtpu: 0.0.40
codegen_flags: <defaults>
</compile_context>

<pallas_src>
import functools

import jax
import jax.numpy as jnp
from jax.experimental import pallas as pl
from jax.experimental.pallas import tpu as pltpu

_MIB = 1024 * 1024


def _cdiv(a, b):
    return -(-a // b)


def _round_up(a, b):
    return _cdiv(a, b) * b


def _bilinear_resize_nchw(x, out_h, out_w):
    """F.interpolate(mode='bilinear', align_corners=False) semantics, NCHW.

    Single-pass 4-corner gather: no (B, C, out_h, W) intermediate; the gathers
    stay in the input dtype and the weighted sum promotes to f32.
    """
    B, C, H, W = x.shape

    def coords(out_size, in_size):
        scale = in_size / out_size
        c = (jnp.arange(out_size, dtype=jnp.float32) + 0.5) * scale - 0.5
        c = jnp.clip(c, 0.0, float(in_size - 1))
        i0 = jnp.floor(c).astype(jnp.int32)
        i1 = jnp.minimum(i0 + 1, in_size - 1)
        lam = c - i0.astype(jnp.float32)
        return i0, i1, lam

    y0, y1, ly = coords(out_h, H)
    x0, x1, lx = coords(out_w, W)
    ly = ly[:, None]
    lx = lx[None, :]
    w00 = (1.0 - ly) * (1.0 - lx)
    w01 = (1.0 - ly) * lx
    w10 = ly * (1.0 - lx)
    w11 = ly * lx

    def corner(yi, xi):
        return x[:, :, yi[:, None], xi[None, :]]

    return (corner(y0, x0) * w00 + corner(y0, x1) * w01 +
            corner(y1, x0) * w10 + corner(y1, x1) * w11)


def _pml_kernel(x_ref, w_ref, out_ref, gram_acc, *, p, n_valid, inv_pp,
                tile_k, chunk_k, num_chunks, kk, needs_mask, use_mxu):
    """Accumulate the (P, P) patch Gram over feature tiles; on this core's
    last tile, finalize the weighted pairwise-MSD mean as a partial scalar."""
    c = pl.program_id(0)
    k = pl.program_id(1)

    @pl.when(k == 0)
    def _():
        gram_acc[...] = jnp.zeros_like(gram_acc)

    # First feature column covered by this grid step.  "Duplicate" tile slots
    # (flat index clamped in the index_map) have base >= n_valid, so the mask
    # below zeroes their whole contribution.
    base = (c * kk + k) * tile_k

    if needs_mask:
        lane = jax.lax.broadcasted_iota(jnp.int32, (p, chunk_k), 1)  # hoisted

    def chunk_body(ci, g):
        off = ci * chunk_k
        if not isinstance(off, int):
            off = pl.multiple_of(off, chunk_k)
        xc = x_ref[:, pl.ds(off, chunk_k)]
        if needs_mask:
            # Select (not multiply): out-of-bounds lanes of the edge block may
            # hold arbitrary bit patterns, including NaN/Inf.
            xc = jnp.where(lane + (base + off) < n_valid, xc, 0.0)
        if use_mxu:
            # Large patch counts: plain MXU Gram update.
            return g + jax.lax.dot_general(
                xc, xc, (((1,), (1,)), ((), ())),
                preferred_element_type=jnp.float32)
        # Small patch counts: a (P x K x P) matmul is MXU weight-push bound,
        # so compute the Gram on the VPU/XLU instead: sublane-broadcast row q,
        # multiply, lane-reduce -> column q of the Gram.
        x32 = xc.astype(jnp.float32)
        cols = [jnp.sum(x32 * x32[q:q + 1, :], axis=1, keepdims=True)
                for q in range(p)]
        return g + jnp.concatenate(cols, axis=1)

    g0 = jnp.zeros((p, p), jnp.float32)
    if num_chunks == 1:
        g = chunk_body(0, g0)
    else:
        g = jax.lax.fori_loop(0, num_chunks, chunk_body, g0, unroll=2)
    gram_acc[...] += g

    @pl.when(k == pl.num_programs(1) - 1)
    def _():
        gram = gram_acc[...]                                 # (P, P) partial Gram
        rr = jax.lax.broadcasted_iota(jnp.int32, (p, p), 0)
        cc = jax.lax.broadcasted_iota(jnp.int32, (p, p), 1)
        eye = (rr == cc).astype(jnp.float32)
        sq_col = jnp.sum(gram * eye, axis=1, keepdims=True)  # ||x_p||^2 (partial)
        sq_row = jnp.sum(gram * eye, axis=0, keepdims=True)  # ||x_q||^2 (partial)
        d = (sq_col + sq_row - 2.0 * gram) * (1.0 / n_valid)
        # Each per-core partial is a sum of squares over a disjoint feature
        # subset, so clamping at 0 only removes negative rounding error.
        d = jnp.maximum(d, 0.0)
        wmap = d * w_ref[...]
        row = jnp.sum(wmap, axis=1, keepdims=True)           # lane reduce
        out_ref[...] = jnp.sum(row, axis=0, keepdims=True) * inv_pp


def _device_kind():
    try:
        return jax.devices()[0].device_kind.lower()
    except Exception:  # pragma: no cover - detection is best-effort
        return ""


def _default_num_cores(kind):
    # v7x has two TensorCores per chip; v5e / v6e have one.
    return 2 if ("v7" in kind or "7x" in kind) else 1


def _bytes_per_step_target(kind):
    # Scale per-grid-step DMA volume with per-TensorCore HBM bandwidth so the
    # ~0.35us fixed step overhead stays well amortized.
    if "v5" in kind:
        return 2 * _MIB
    if "v7" in kind or "7x" in kind:
        return 8 * _MIB
    return 4 * _MIB  # v6e and default


def patch_manifold_loss_pre(prediction, weights, *, alpha, split, filter=None,
                            feature_dtype=None, num_cores=None,
                            bytes_per_step=None):
    """Equivalent of PatchManifoldLossPre(alpha, split, filter).forward."""
    del filter  # unused by the reference forward pass
    if not jnp.issubdtype(prediction.dtype, jnp.floating):
        prediction = prediction.astype(jnp.float32)
    B, C, H, W = prediction.shape

    # resample() semantics from the reference module.
    h = int((H / split) / 10)
    w = int((W / split) / 10)
    if h <= 0 or w <= 0:
        raise ValueError(
            f"PatchManifoldLossPre needs H, W >= 10*split "
            f"(got H={H}, W={W}, split={split}).")
    rh, rw = h * split, w * split
    x = _bilinear_resize_nchw(prediction, rh, rw)            # (B, C, S*h, S*w)

    # TODO(synk): the resize + patch gather/transpose are layout glue left to
    # XLA (they dominate end-to-end HBM traffic for realistic shapes); fusing
    # them into the kernel needs an in-kernel 5-D transpose Mosaic does not
    # lower cleanly.
    P = split * split
    N = B * C * h * w
    xp = x.reshape(B, C, split, h, split, w)
    xp = jnp.transpose(xp, (2, 4, 0, 1, 3, 5)).reshape(P, N)
    if feature_dtype is not None:
        # Opt-in low-precision feature matrix (halves kernel HBM traffic, adds
        # Gram-identity rounding); accumulation in the kernel stays f32.
        xp = xp.astype(feature_dtype)
    itemsize = jnp.dtype(xp.dtype).itemsize

    # Effective (P, P) weights: (map_input * weights).mean() over a batch of
    # weights equals using the batch-mean of the weights.
    wts = weights.astype(jnp.float32)
    if wts.ndim == 3:
        wts = jnp.mean(wts, axis=0)
    if wts.shape != (P, P):
        raise ValueError(f"weights must be (P, P) or (B, P, P) with P={P}.")

    kind = _device_kind()
    if num_cores is None:
        num_cores = _default_num_cores(kind)
    if bytes_per_step is None:
        bytes_per_step = _bytes_per_step_target(kind)

    # Feature-axis tiling.  The patch axis uses full-dim (P, tk) blocks (no
    # sublane padding); the feature axis is never jnp.pad'ed - the partial
    # edge tile is masked in-kernel instead.
    ck = 1024 if P <= 8 else 512             # in-kernel sub-chunk (vreg bound)
    if N < ck:
        # Tiny problem: one full-width block, no masking, no inner loop.
        tk, t_tiles, cores, kk = N, 1, 1, 1
        chunk_k, num_chunks, needs_mask = N, 1, False
    else:
        tk_cap = max(ck, ((12 * _MIB // (P * itemsize)) // ck) * ck)
        tk = max(ck, _round_up(bytes_per_step // (P * itemsize), ck))
        tk = min(tk, tk_cap, (N // ck) * ck)  # tk <= N: first block in-bounds
        t_tiles = _cdiv(N, tk)
        cores = num_cores if (num_cores > 1 and t_tiles >= num_cores) else 1
        kk = _cdiv(t_tiles, cores)
        chunk_k, num_chunks = ck, tk // ck
        needs_mask = (cores * kk * tk != N)

    kernel = functools.partial(
        _pml_kernel, p=P, n_valid=N, inv_pp=1.0 / float(P * P),
        tile_k=tk, chunk_k=chunk_k, num_chunks=num_chunks, kk=kk,
        needs_mask=needs_mask, use_mxu=(P > 16))

    # Clamp the flat tile index so duplicate grid slots re-read the last valid
    # tile (their contribution is zeroed by the in-kernel mask).
    x_index_map = lambda c, k: (0, jnp.minimum(c * kk + k, t_tiles - 1))

    partials = pl.pallas_call(
        kernel,
        out_shape=jax.ShapeDtypeStruct((cores, 1, 1), jnp.float32),
        grid_spec=pltpu.PrefetchScalarGridSpec(
            num_scalar_prefetch=0,
            grid=(cores, kk),
            in_specs=[
                pl.BlockSpec((P, tk), x_index_map),
                pl.BlockSpec((P, P), lambda c, k: (0, 0)),
            ],
            out_specs=pl.BlockSpec((None, 1, 1), lambda c, k: (c, 0, 0)),
            scratch_shapes=[pltpu.VMEM((P, P), jnp.float32)],
        ),
        compiler_params=pltpu.CompilerParams(
            dimension_semantics=("parallel", "arbitrary"),
            vmem_limit_bytes=32 * _MIB),
    )(xp, wts)

    # Sum the per-core partial means; * alpha per the module's forward().
    return jnp.sum(partials) * alpha


if __name__ == "__main__":
    key = jax.random.PRNGKey(0)
    k1, k2 = jax.random.split(key)

    alpha, split = 0.5, 2
    B, C, H, W = 2, 4, 40, 40  # H, W >= 10*split so resample() gives h = w = 2

    prediction = jax.random.normal(k1, (B, C, H, W), dtype=jnp.float32)
    weights = jax.random.uniform(k2, (B, split ** 2, split ** 2),
                                 dtype=jnp.float32)

    loss_fn = jax.jit(functools.partial(patch_manifold_loss_pre,
                                        alpha=alpha, split=split))
    loss = loss_fn(prediction, weights)
    jax.block_until_ready(loss)
    print("KERNEL_OK")
</pallas_src>

<mosaic_0001>
module attributes {stable_mosaic.version = 11 : i64} {
  func.func @_pml_kernel(%arg0: i32, %arg1: i32, %arg2: memref<4x32xf32, #tpu.memory_space<vmem>>, %arg3: memref<4x4xf32, #tpu.memory_space<vmem>>, %arg4: memref<1x1x1xf32, #tpu.memory_space<vmem>>, %arg5: memref<4x4xf32, #tpu.memory_space<vmem>>) attributes {dimension_semantics = [#tpu.dimension_semantics<parallel>, #tpu.dimension_semantics<arbitrary>], iteration_bounds = array<i64: 1, 1>, scalar_prefetch = 0 : i64, scratch_operands = 1 : i64, tpu.core_type = #tpu.core_type<tc>, window_params = [{transform_indices = @transform_0, window_bounds = array<i64: 4, 32>}, {pipeline_mode = #tpu.pipeline_mode<synchronous>, transform_indices = @transform_1, window_bounds = array<i64: 4, 4>}, {transform_indices = @transform_2, window_bounds = array<i64: 1, 1, 1>}]} {
    %c0_i32 = arith.constant 0 : i32
    %0 = arith.cmpi eq, %arg1, %c0_i32 : i32
    %1 = arith.extui %0 : i1 to i32
    %c0_i32_0 = arith.constant 0 : i32
    %2 = arith.cmpi ne, %1, %c0_i32_0 : i32
    scf.if %2 {
      %cst_12 = arith.constant 0.000000e+00 : f32
      %33 = vector.broadcast %cst_12 : f32 to vector<4x4xf32>
      %c0_13 = arith.constant 0 : index
      %c0_14 = arith.constant 0 : index
      %34 = vector.load %arg5[%c0_13, %c0_14] : memref<4x4xf32, #tpu.memory_space<vmem>>, vector<4x4xf32>
      tpu.vector_store %arg5[%c0_13, %c0_14], %33 {strides = array<i32>} : memref<4x4xf32, #tpu.memory_space<vmem>>, vector<4x4xf32>,
    } else {
    }
    %cst = arith.constant 0.000000e+00 : f32
    %3 = vector.broadcast %cst : f32 to vector<4x4xf32>
    %c0 = arith.constant 0 : index
    %c0_1 = arith.constant 0 : index
    %4 = vector.load %arg2[%c0, %c0_1] : memref<4x32xf32, #tpu.memory_space<vmem>>, vector<4x32xf32>
    %5 = vector.extract_strided_slice %4 {offsets = [0, 0], sizes = [1, 32], strides = [1, 1]} : vector<4x32xf32> to vector<1x32xf32>
    %6 = vector.broadcast %5 : vector<1x32xf32> to vector<4x32xf32>
    %7 = arith.mulf %4, %6 : vector<4x32xf32>
    %cst_2 = arith.constant dense<0.000000e+00> : vector<4xf32>
    %8 = vector.multi_reduction <add>, %7, %cst_2 [1] : vector<4x32xf32> to vector<4xf32>
    %9 = vector.shape_cast %8 : vector<4xf32> to vector<4x1xf32>
    %10 = vector.extract_strided_slice %4 {offsets = [1, 0], sizes = [1, 32], strides = [1, 1]} : vector<4x32xf32> to vector<1x32xf32>
    %11 = vector.broadcast %10 : vector<1x32xf32> to vector<4x32xf32>
    %12 = arith.mulf %4, %11 : vector<4x32xf32>
    %cst_3 = arith.constant dense<0.000000e+00> : vector<4xf32>
    %13 = vector.multi_reduction <add>, %12, %cst_3 [1] : vector<4x32xf32> to vector<4xf32>
    %14 = vector.shape_cast %13 : vector<4xf32> to vector<4x1xf32>
    %15 = vector.extract_strided_slice %4 {offsets = [2, 0], sizes = [1, 32], strides = [1, 1]} : vector<4x32xf32> to vector<1x32xf32>
    %16 = vector.broadcast %15 : vector<1x32xf32> to vector<4x32xf32>
    %17 = arith.mulf %4, %16 : vector<4x32xf32>
    %cst_4 = arith.constant dense<0.000000e+00> : vector<4xf32>
    %18 = vector.multi_reduction <add>, %17, %cst_4 [1] : vector<4x32xf32> to vector<4xf32>
    %19 = vector.shape_cast %18 : vector<4xf32> to vector<4x1xf32>
    %20 = vector.extract_strided_slice %4 {offsets = [3, 0], sizes = [1, 32], strides = [1, 1]} : vector<4x32xf32> to vector<1x32xf32>
    %21 = vector.broadcast %20 : vector<1x32xf32> to vector<4x32xf32>
    %22 = arith.mulf %4, %21 : vector<4x32xf32>
    %cst_5 = arith.constant dense<0.000000e+00> : vector<4xf32>
    %23 = vector.multi_reduction <add>, %22, %cst_5 [1] : vector<4x32xf32> to vector<4xf32>
    %24 = vector.shape_cast %23 : vector<4xf32> to vector<4x1xf32>
    %25 = tpu.concatenate %9, %14, %19, %24 in 1 : vector<4x1xf32>, vector<4x1xf32>, vector<4x1xf32>, vector<4x1xf32> -> vector<4x4xf32>
    %26 = arith.addf %3, %25 : vector<4x4xf32>
    %c0_6 = arith.constant 0 : index
    %c0_7 = arith.constant 0 : index
    %27 = vector.load %arg5[%c0_6, %c0_7] : memref<4x4xf32, #tpu.memory_space<vmem>>, vector<4x4xf32>
    %28 = arith.addf %27, %26 : vector<4x4xf32>
    %c0_8 = arith.constant 0 : index
    %c0_9 = arith.constant 0 : index
    %29 = vector.load %arg5[%c0_8, %c0_9] : memref<4x4xf32, #tpu.memory_space<vmem>>, vector<4x4xf32>
    tpu.vector_store %arg5[%c0_8, %c0_9], %28 {strides = array<i32>} : memref<4x4xf32, #tpu.memory_space<vmem>>, vector<4x4xf32>,
    %c0_i32_10 = arith.constant 0 : i32
    %30 = arith.cmpi eq, %arg1, %c0_i32_10 : i32
    %31 = arith.extui %30 : i1 to i32
    %c0_i32_11 = arith.constant 0 : i32
    %32 = arith.cmpi ne, %31, %c0_i32_11 : i32
    scf.if %32 {
      %c0_12 = arith.constant 0 : index
      %c0_13 = arith.constant 0 : index
      %33 = vector.load %arg5[%c0_12, %c0_13] : memref<4x4xf32, #tpu.memory_space<vmem>>, vector<4x4xf32>
      %34 = tpu.iota {dimensions = array<i32: 0>} : vector<4x4xi32>
      %35 = tpu.iota {dimensions = array<i32: 1>} : vector<4x4xi32>
      %36 = arith.cmpi eq, %34, %35 : vector<4x4xi32>
      %37 = arith.extui %36 : vector<4x4xi1> to vector<4x4xi32>
      %38 = arith.sitofp %37 : vector<4x4xi32> to vector<4x4xf32>
      %39 = arith.mulf %33, %38 : vector<4x4xf32>
      %cst_14 = arith.constant dense<0.000000e+00> : vector<4xf32>
      %40 = vector.multi_reduction <add>, %39, %cst_14 [1] : vector<4x4xf32> to vector<4xf32>
      %41 = vector.shape_cast %40 : vector<4xf32> to vector<4x1xf32>
      %42 = arith.mulf %33, %38 : vector<4x4xf32>
      %cst_15 = arith.constant dense<0.000000e+00> : vector<4xf32>
      %43 = vector.multi_reduction <add>, %42, %cst_15 [0] : vector<4x4xf32> to vector<4xf32>
      %44 = vector.shape_cast %43 : vector<4xf32> to vector<1x4xf32>
      %45 = vector.broadcast %41 : vector<4x1xf32> to vector<4x4xf32>
      %46 = vector.broadcast %44 : vector<1x4xf32> to vector<4x4xf32>
      %47 = arith.addf %45, %46 : vector<4x4xf32>
      %cst_16 = arith.constant 2.000000e+00 : f32
      %48 = vector.broadcast %cst_16 : f32 to vector<4x4xf32>
      %49 = arith.mulf %48, %33 : vector<4x4xf32>
      %50 = arith.subf %47, %49 : vector<4x4xf32>
      %cst_17 = arith.constant 3.125000e-02 : f32
      %51 = vector.broadcast %cst_17 : f32 to vector<4x4xf32>
      %52 = arith.mulf %50, %51 : vector<4x4xf32>
      %cst_18 = arith.constant 0.000000e+00 : f32
      %53 = vector.broadcast %cst_18 : f32 to vector<4x4xf32>
      %54 = arith.maximumf %52, %53 : vector<4x4xf32>
      %c0_19 = arith.constant 0 : index
      %c0_20 = arith.constant 0 : index
      %55 = vector.load %arg3[%c0_19, %c0_20] : memref<4x4xf32, #tpu.memory_space<vmem>>, vector<4x4xf32>
      %56 = arith.mulf %54, %55 : vector<4x4xf32>
      %cst_21 = arith.constant dense<0.000000e+00> : vector<4xf32>
      %57 = vector.multi_reduction <add>, %56, %cst_21 [1] : vector<4x4xf32> to vector<4xf32>
      %58 = vector.shape_cast %57 : vector<4xf32> to vector<4x1xf32>
      %cst_22 = arith.constant dense<0.000000e+00> : vector<1xf32>
      %59 = vector.multi_reduction <add>, %58, %cst_22 [0] : vector<4x1xf32> to vector<1xf32>
      %60 = vector.shape_cast %59 : vector<1xf32> to vector<1x1xf32>
      %cst_23 = arith.constant 6.250000e-02 : f32
      %61 = vector.broadcast %cst_23 : f32 to vector<1x1xf32>
      %62 = arith.mulf %60, %61 : vector<1x1xf32>
      %c0_24 = arith.constant 0 : index
      %c0_25 = arith.constant 0 : index
      %c0_26 = arith.constant 0 : index
      %63 = vector.load %arg4[%c0_24, %c0_25, %c0_26] : memref<1x1x1xf32, #tpu.memory_space<vmem>>, vector<1x1x1xf32>
      %64 = vector.shape_cast %63 : vector<1x1x1xf32> to vector<1x1xf32>
      %65 = vector.shape_cast %62 : vector<1x1xf32> to vector<1x1x1xf32>
      tpu.vector_store %arg4[%c0_24, %c0_25, %c0_26], %65 {strides = array<i32>} : memref<1x1x1xf32, #tpu.memory_space<vmem>>, vector<1x1x1xf32>,
    } else {
    }
    return
  }
  func.func @transform_0(%arg0: i32, %arg1: i32) -> (i32, i32) {
    %c1_i32 = arith.constant 1 : i32
    %0 = arith.muli %arg0, %c1_i32 : i32
    %1 = arith.addi %0, %arg1 : i32
    %c0_i32 = arith.constant 0 : i32
    %2 = arith.minsi %1, %c0_i32 : i32
    %c0_i32_0 = arith.constant 0 : i32
    %c0_i32_1 = arith.constant 0 : i32
    return %c0_i32_0, %2 : i32, i32
  }
  func.func @transform_1(%arg0: i32, %arg1: i32) -> (i32, i32) {
    %c0_i32 = arith.constant 0 : i32
    %c0_i32_0 = arith.constant 0 : i32
    %c0_i32_1 = arith.constant 0 : i32
    return %c0_i32, %c0_i32_0 : i32, i32
  }
  func.func @transform_2(%arg0: i32, %arg1: i32) -> (i32, i32, i32) {
    %c0_i32 = arith.constant 0 : i32
    %c0_i32_0 = arith.constant 0 : i32
    %c0_i32_1 = arith.constant 0 : i32
    return %arg0, %c0_i32, %c0_i32_0 : i32, i32, i32
  }
}

</mosaic_0001>

<llo_original>
// kernel: patch_manifold_loss_pre.1
$region0: #{patch_manifold_loss_pre.1}
  #allocation0 [shape = 'u32[]', space=smem, size = 0x4, offset = 0x4, fixed_abs, tag = 'smem constant byte address 0x4 - core index']
  #allocation1 [shape = 'u32[144,128]{1,0:T(1,128)}', space=vmem, size = 0x12000, scoped, tag = 'internal scratch']
  #allocation2 [shape = 'f32[4,4]{1,0:T(4,128)}', space=vmem, size = 0x800, scoped, tag = 'scratch operand']
  %s0 = inlined_call_operand.vmem [shape: f32[4,32], index: 0, kind: input, shape index: {}]
  %s1 = inlined_call_operand.vmem [shape: f32[4,4], index: 1, kind: input, shape index: {}]
  %s2 = inlined_call_operand.hbm [shape: f32[1,1,1], index: 2, kind: output, shape index: {}]
  %s3 = sld [smem:[#allocation0]]
  $region26: #{patch_manifold_loss_pre.1} parent=0
    _
  %s5 = ssub.s32 1, %s3
  %s6 = scalar_select 0, %s5, %s3
  $region1: #{patch_manifold_loss_pre.1} parent=0
    #allocation3 [shape = 'u8[512]{0}', space=vmem, size = 0x400, scoped, tag = 'output window, operand 0, single buffered']
    #allocation4 [shape = 's32[1]{0}', space=sflag, size = 0x4, scoped, tag = 'scoped memory for patch_manifold_loss_pre.1']
    %7 = vsyncpa [#allocation4], 0
    // Predicated region
    $region2: #{patch_manifold_loss_pre.1} parent=1 // pred_check
      _
    $region3: #{patch_manifold_loss_pre.1} parent=1 // pred_check_branch
      %9 = sbr.rel (0) target = $region5
    $region4: #{patch_manifold_loss_pre.1} parent=1 // pred_region
      %s10 = sadd.s32 0, 0
      %p11 = scmp.lt.s32.totalorder %s10, 0
      %s12 = scalar_select %p11, %s10, 0
      %p13 = scmp.lt.s32.totalorder %s12, 0
      %s14 = scalar_select %p13, %s12, 0
      %s15 = smul.addr %s14, 4
      %s16 = scalar_lea.vmem %s0, %s15
      %s17 = sadd.s32 0, 0
      %p18 = scmp.lt.s32.totalorder %s17, 0
      %s19 = scalar_select %p18, %s17, 0
    $region5: #{patch_manifold_loss_pre.1} parent=1 // pred_fallthru
      _
    // Predicated region
    $region6: #{patch_manifold_loss_pre.1} parent=1 // pred_check
      _
    $region7: #{patch_manifold_loss_pre.1} parent=1 // pred_check_branch
      %21 = sbr.rel (0) target = $region9
    $region8: #{patch_manifold_loss_pre.1} parent=1 // pred_region
      _
    $region9: #{patch_manifold_loss_pre.1} parent=1 // pred_fallthru
      _
    %s22 = sadd.s32 0, 0
    %p23 = scmp.lt.s32.totalorder %s22, 0
    %s24 = scalar_select %p23, %s22, 0
    %p25 = scmp.lt.s32.totalorder %s24, 0
    %s26 = scalar_select %p25, %s24, 0
    %s27 = smul.addr %s26, 4
    %s28 = scalar_lea.vmem %s0, %s27
    %s29 = sadd.s32 0, 0
    %p30 = scmp.lt.s32.totalorder %s29, 0
    %s31 = scalar_select %p30, %s29, 0
    %p32 = scmp.lt.s32.totalorder %s31, 0
    %s33 = scalar_select %p32, %s31, 0
    %s34 = smul.addr %s33, 4
    %s35 = scalar_lea.vmem %s0, %s34
    %s36 = sadd.s32 0, 0
    %p37 = scmp.lt.s32.totalorder %s36, 0
    %s38 = scalar_select %p37, %s36, 0
    %p39 = scmp.eq.s32.totalorder 0, 0
    // Predicated region
    $region10: #{patch_manifold_loss_pre.1} parent=1 // pred_check
      %p40 = pneg %p39
    $region11: #{patch_manifold_loss_pre.1} parent=1 // pred_check_branch
      %42 = sbr.rel (%p40) target = $region13
    $region12: #{patch_manifold_loss_pre.1} parent=1 // pred_region
      %vm43 = vcmask 27648
      %44 = vst.msk [vmem:[#allocation2] sm:$0xf] %vm43, 0.0
    $region13: #{patch_manifold_loss_pre.1} parent=1 // pred_fallthru
      _
    %v45 = vld [vmem:[%s35] sm:$0xf]
    %v46 = vlaneseq
    %v47 = vshrl.u32 %v46, 7
    %v48 = vsub.s32 0, %v47
    %v49 = vrot.slane %v45, %v48
    %v50 = vmul.f32 %v45, %v49
    %vm51 = vcmask 257024
    %v52 = vsel %vm51, %v50, 0.0
    %53 = vadd.xlane.f32.xlu0 %v52
    %v54 = vpop.xlane.xlu0 %53
    %v55 = vlaneseq
    %v56 = vshrl.u32 %v55, 7
    %v57 = vsub.s32 1, %v56
    %v58 = vrot.slane %v45, %v57
    %v59 = vmul.f32 %v45, %v58
    %v60 = vsel %vm51, %v59, 0.0
    %61 = vadd.xlane.f32.xlu0 %v60
    %v62 = vpop.xlane.xlu0 %61
    %v63 = vlaneseq
    %v64 = vshrl.u32 %v63, 7
    %v65 = vsub.s32 2, %v64
    %v66 = vrot.slane %v45, %v65
    %v67 = vmul.f32 %v45, %v66
    %v68 = vsel %vm51, %v67, 0.0
    %69 = vadd.xlane.f32.xlu0 %v68
    %v70 = vpop.xlane.xlu0 %69
    %v71 = vlaneseq
    %v72 = vshrl.u32 %v71, 7
    %v73 = vsub.s32 3, %v72
    %v74 = vrot.slane %v45, %v73
    %v75 = vmul.f32 %v45, %v74
    %v76 = vsel %vm51, %v75, 0.0
    %77 = vadd.xlane.f32.xlu0 %v76
    %v78 = vpop.xlane.xlu0 %77
    %vm79 = vcmask 7168
    %v80 = vsel %vm79, %v54, %v62
    %vm81 = vcmask 15360
    %v82 = vsel %vm81, %v80, %v70
    %vm83 = vcmask 23552
    %v84 = vsel %vm83, %v82, %v78
    %v85 = vadd.f32 %v84, 0.0
    %v86 = vld [vmem:[#allocation2] sm:$0xf]
    %v87 = vadd.f32 %v86, %v85
    %vm88 = vcmask 27648
    %89 = vst.msk [vmem:[#allocation2] sm:$0xf] %vm88, %v87
    // Predicated region
    $region14: #{patch_manifold_loss_pre.1} parent=1 // pred_check
      %p90 = pneg %p39
    $region15: #{patch_manifold_loss_pre.1} parent=1 // pred_check_branch
      %92 = sbr.rel (%p90) target = $region17
    $region16: #{patch_manifold_loss_pre.1} parent=1 // pred_region
      %v93 = vld [vmem:[#allocation2] sm:$0xf]
      %v94 = vlaneseq
      %v95 = vshrl.u32 %v94, 7
      %v96 = vlaneseq
      %v97 = vand.u32 %v96, 127
      %vm98 = vcmp.eq.s32.totalorder %v95, %v97
      %v99 = vsel %vm98, 1, 0
      %v100 = vcvt.s32.f32 %v99
      %v101 = vmul.f32 %v93, %v100
      %v102 = vsel %vm88, %v101, 0.0
      %103 = vadd.xlane.f32.xlu0 %v102
      %v104 = vpop.xlane.xlu0 %103
      %v105 = vrot.slane %v102, 4
      %v106 = vadd.f32 %v102, %v105
      %v107 = vrot.slane %v106, 2
      %v108 = vadd.f32 %v106, %v107
      %v109 = vrot.slane %v108, 1
      %v110 = vadd.f32 %v108, %v109
      %v111 = vadd.f32 %v104, %v110
      %v112 = vmul.f32 %v93, 2.0
      %v113 = vsub.f32 %v111, %v112
      %v114 = vmul.f32 %v113, 0.03125
      %v115 = vmax.f32 %v114, 0.0
      %v116 = vld [vmem:[%s1] sm:$0xf]
      %v117 = vmul.f32 %v115, %v116
      %v118 = vsel %vm88, %v117, 0.0
      %119 = vadd.xlane.f32.xlu0 %v118
      %v120 = vpop.xlane.xlu0 %119
      %vm121 = vcmask 1043456
      %v122 = vsel %vm121, %v120, 0.0
      %v123 = vrot.slane %v122, 4
      %v124 = vadd.f32 %v122, %v123
      %v125 = vrot.slane %v124, 2
      %v126 = vadd.f32 %v124, %v125
      %v127 = vrot.slane %v126, 1
      %v128 = vadd.f32 %v126, %v127
      %v129 = vmul.f32 %v128, 0.0625
      %vm130 = vcmask 0
      %131 = vst.msk [vmem:[#allocation3] sm:$0x1] %vm130, %v129
    $region17: #{patch_manifold_loss_pre.1} parent=1 // pred_fallthru
      _
    // Predicated region
    $region18: #{patch_manifold_loss_pre.1} parent=1 // pred_check
      _
    $region19: #{patch_manifold_loss_pre.1} parent=1 // pred_check_branch
      %133 = sbr.rel (0) target = $region21
    $region20: #{patch_manifold_loss_pre.1} parent=1 // pred_region
      %s135 = ssub.s32 16, 16
      %136 = vsyncadd [#allocation4], %s135
      %s138 = sshll.u32 [#allocation3], 4
      %s139 = int_to_ptr.vmem [resolvable:$true] %s138
      %141 = dma.vmem_to_hbm [thread:$0]  %s139, 16, %s2, [#allocation4]
    $region21: #{patch_manifold_loss_pre.1} parent=1 // pred_fallthru
      _
    // Predicated region
    $region22: #{patch_manifold_loss_pre.1} parent=1 // pred_check
      _
    $region23: #{patch_manifold_loss_pre.1} parent=1 // pred_check_branch
      %143 = sbr.rel (0) target = $region25
    $region24: #{patch_manifold_loss_pre.1} parent=1 // pred_region
      %144 = dma.done [#allocation4], 16
    $region25: #{patch_manifold_loss_pre.1} parent=1 // pred_fallthru
      _
    %145 = vsyncpa [#allocation4], 1

</llo_original>
